<compile_context>
chip_gen: v6e
topology: v6e:2x2x1
jax: 0.10.0
libtpu: 0.0.40
codegen_flags: <defaults>
</compile_context>

<pallas_src>
import jax
import jax.numpy as jnp
from jax.experimental import pallas as pl
from jax.experimental.pallas import tpu as pltpu


def _round_up(x, m):
    return (x + m - 1) // m * m


def _time_embed_kernel(x_ref, w1_ref, b1_ref, w2_ref, b2_ref, out_ref):
    # Linear 1: cast LHS to the (possibly bf16) weight dtype so the MXU uses
    # its native path; accumulate in f32.
    x = x_ref[...].astype(w1_ref.dtype)
    h = jnp.dot(x, w1_ref[...], preferred_element_type=jnp.float32)
    h = h + b1_ref[...]                       # f32 bias add (VALU)
    h = h * jax.nn.sigmoid(h)                 # SiLU: sigmoid -> EUP, mul -> VALU
    # Linear 2
    o = jnp.dot(h.astype(w2_ref.dtype), w2_ref[...],
                preferred_element_type=jnp.float32)
    o = o + b2_ref[...]
    out_ref[...] = o.astype(out_ref.dtype)


def prepare_time_embed_params(w1, b1, w2, b2, matmul_dtype=jnp.bfloat16):
    """One-time parameter prep (call OUTSIDE jit): weights in the MXU dtype,
    biases as f32 row vectors.  Keeps the jitted forward free of per-call
    reshape/convert ops."""
    return (jnp.asarray(w1, matmul_dtype),
            jnp.asarray(b1, jnp.float32).reshape(1, -1),
            jnp.asarray(w2, matmul_dtype),
            jnp.asarray(b2, jnp.float32).reshape(1, -1))


def _cost_estimate(B, Cin, Cout, x_dtype, w_dtype, out_dtype):
    isz = lambda dt: jnp.dtype(dt).itemsize
    return pl.CostEstimate(
        flops=2 * B * (Cin * Cout + Cout * Cout),
        transcendentals=B * Cout,                      # sigmoid
        bytes_accessed=(B * Cin * isz(x_dtype)
                        + (Cin * Cout + Cout * Cout) * isz(w_dtype)
                        + 2 * Cout * 4                 # biases (f32)
                        + B * Cout * isz(out_dtype)))


def time_style_separate_embed(time_emb, cond, w1, b1, w2, b2, *,
                              small_batch_rows=512, max_batch_tile=2048):
    """Returns (emb, time_emb_out, style), mirroring EmbedReturn."""
    style = cond                       # nn.Identity(); emb = style.
    if time_emb is None:
        return style, None, style

    out_dtype = time_emb.dtype
    B, Cin = time_emb.shape
    Cout = w2.shape[-1]
    # No-ops when params came through prepare_time_embed_params().
    b1 = jnp.asarray(b1, jnp.float32).reshape(1, -1)
    b2 = jnp.asarray(b2, jnp.float32).reshape(1, -1)

    cost = _cost_estimate(B, Cin, Cout, time_emb.dtype, w1.dtype, out_dtype)

    if B <= small_batch_rows:
        # Tiny batch: grid-less call, whole arrays resident in VMEM, zero
        # wrapper-side padding or slicing -> single op launch.
        vmem = pl.BlockSpec(memory_space=pltpu.MemorySpace.VMEM)
        time_out = pl.pallas_call(
            _time_embed_kernel,
            out_shape=jax.ShapeDtypeStruct((B, Cout), out_dtype),
            in_specs=[vmem] * 5,
            out_specs=vmem,
            cost_estimate=cost,
        )(time_emb, w1, b1, w2, b2)
        return style, time_out, style

    # Large batch: 1-D "parallel" grid over row tiles.  Tile is capped to
    # amortize per-step pipeline overhead while guaranteeing >= 2 grid steps
    # so v7x's two TensorCores both get work (no-op on v5e/v6e).
    batch_tile = min(max_batch_tile, _round_up(pl.cdiv(B, 2), 8))
    grid_n = pl.cdiv(B, batch_tile)
    Bt = grid_n * batch_tile
    x = time_emb if Bt == B else jnp.pad(time_emb, ((0, Bt - B), (0, 0)))

    out_p = pl.pallas_call(
        _time_embed_kernel,
        out_shape=jax.ShapeDtypeStruct((Bt, Cout), out_dtype),
        grid=(grid_n,),
        in_specs=[
            pl.BlockSpec((batch_tile, Cin), lambda i: (i, 0)),
            pl.BlockSpec((Cin, Cout), lambda i: (0, 0)),   # weights stay resident
            pl.BlockSpec((1, Cout), lambda i: (0, 0)),
            pl.BlockSpec((Cout, Cout), lambda i: (0, 0)),
            pl.BlockSpec((1, Cout), lambda i: (0, 0)),
        ],
        # Output block is the true Cout width (last dim == full array dim):
        # no 128-column padding, no post-slice, half the HBM writeback.
        out_specs=pl.BlockSpec((batch_tile, Cout), lambda i: (i, 0)),
        compiler_params=pltpu.CompilerParams(
            dimension_semantics=("parallel",)),
        cost_estimate=cost,
    )(x, w1, b1, w2, b2)

    time_out = out_p if Bt == B else out_p[:B]
    return style, time_out, style


if __name__ == "__main__":
    key = jax.random.PRNGKey(0)
    ks = jax.random.split(key, 8)

    time_channels, time_out_channels = 32, 64

    # Deterministic synthetic parameters (shapes from the nn.Linear layers).
    w1 = jax.random.normal(ks[2], (time_channels, time_out_channels),
                           dtype=jnp.float32) * 0.05
    b1 = jax.random.normal(ks[3], (time_out_channels,), dtype=jnp.float32) * 0.05
    w2 = jax.random.normal(ks[4], (time_out_channels, time_out_channels),
                           dtype=jnp.float32) * 0.05
    b2 = jax.random.normal(ks[5], (time_out_channels,), dtype=jnp.float32) * 0.05

    def reference(x):
        h = x @ w1 + b1
        h = h * jax.nn.sigmoid(h)
        return h @ w2 + b2

    # bf16 MXU operands (recommended on v5e/v6e/v7x) and an f32 variant for a
    # bit-tight check — both prepared once, outside jit.
    pw1, pb1, pw2, pb2 = prepare_time_embed_params(w1, b1, w2, b2, jnp.bfloat16)
    fw1, fb1, fw2, fb2 = prepare_time_embed_params(w1, b1, w2, b2, jnp.float32)

    fwd = jax.jit(time_style_separate_embed)

    # ---- tiny batch (B=2): grid-less VMEM path -------------------------------
    B = 2
    x = jax.random.normal(ks[0], (B, time_channels), dtype=jnp.float32)
    cond = jax.random.normal(ks[1], (B, time_out_channels), dtype=jnp.float32)

    emb, t_bf16, style = fwd(x, cond, pw1, pb1, pw2, pb2)
    _, t_f32, _ = fwd(x, cond, fw1, fb1, fw2, fb2)
    jax.block_until_ready((emb, t_bf16, t_f32, style))
    r = reference(x)
    assert jnp.allclose(t_f32, r, atol=1e-5, rtol=1e-5), "small-batch f32 MLP mismatch"
    assert jnp.allclose(t_bf16, r, atol=2e-2, rtol=2e-2), "small-batch bf16 MLP mismatch"
    assert jnp.array_equal(emb, cond) and jnp.array_equal(style, cond), \
        "style identity mismatch"

    # ---- larger batch (B=1200): gridded "parallel" path (2 steps) ------------
    Bl = 1200
    xl = jax.random.normal(ks[6], (Bl, time_channels), dtype=jnp.float32)
    condl = jax.random.normal(ks[7], (Bl, time_out_channels), dtype=jnp.float32)

    embl, tl_bf16, stylel = fwd(xl, condl, pw1, pb1, pw2, pb2)
    _, tl_f32, _ = fwd(xl, condl, fw1, fb1, fw2, fb2)
    jax.block_until_ready((embl, tl_bf16, tl_f32, stylel))
    rl = reference(xl)
    assert jnp.allclose(tl_f32, rl, atol=1e-5, rtol=1e-5), "large-batch f32 MLP mismatch"
    assert jnp.allclose(tl_bf16, rl, atol=2e-2, rtol=2e-2), "large-batch bf16 MLP mismatch"
    assert jnp.array_equal(embl, condl) and jnp.array_equal(stylel, condl), \
        "large-batch style identity mismatch"

    # ---- time_emb=None path ---------------------------------------------------
    emb_n, t_n, style_n = time_style_separate_embed(None, cond, pw1, pb1, pw2, pb2)
    assert t_n is None and jnp.array_equal(emb_n, cond) and jnp.array_equal(style_n, cond)

    print("KERNEL_OK")
</pallas_src>

<mosaic_0001>
module attributes {stable_mosaic.version = 11 : i64} {
  func.func @_time_embed_kernel(%arg0: memref<2x32xf32, #tpu.memory_space<vmem>>, %arg1: memref<32x64xbf16, #tpu.memory_space<vmem>>, %arg2: memref<1x64xf32, #tpu.memory_space<vmem>>, %arg3: memref<64x64xbf16, #tpu.memory_space<vmem>>, %arg4: memref<1x64xf32, #tpu.memory_space<vmem>>, %arg5: memref<2x64xf32, #tpu.memory_space<vmem>>) attributes {dimension_semantics = [], scalar_prefetch = 0 : i64, scratch_operands = 0 : i64, tpu.core_type = #tpu.core_type<tc>} {
    %c0 = arith.constant 0 : index
    %c0_0 = arith.constant 0 : index
    %0 = vector.load %arg0[%c0, %c0_0] : memref<2x32xf32, #tpu.memory_space<vmem>>, vector<2x32xf32>
    %1 = arith.truncf %0 : vector<2x32xf32> to vector<2x32xbf16>
    %c0_1 = arith.constant 0 : index
    %c0_2 = arith.constant 0 : index
    %2 = vector.load %arg1[%c0_1, %c0_2] : memref<32x64xbf16, #tpu.memory_space<vmem>>, vector<32x64xbf16>
    %cst = arith.constant dense<0.000000e+00> : vector<2x64xf32>
    %3 = tpu.matmul %1, %2, %cst {dimension_numbers = #tpu.dot_dimension_numbers<[1], [0], [0], [1], [0, 0, 1, 1], [], []>} : vector<2x32xbf16>, vector<32x64xbf16>, vector<2x64xf32> -> vector<2x64xf32>
    %c0_3 = arith.constant 0 : index
    %c0_4 = arith.constant 0 : index
    %4 = vector.load %arg2[%c0_3, %c0_4] : memref<1x64xf32, #tpu.memory_space<vmem>>, vector<1x64xf32>
    %5 = vector.broadcast %4 : vector<1x64xf32> to vector<2x64xf32>
    %6 = arith.addf %3, %5 : vector<2x64xf32>
    %7 = arith.negf %6 : vector<2x64xf32>
    %8 = math.exp %7 : vector<2x64xf32>
    %cst_5 = arith.constant 1.000000e+00 : f32
    %9 = vector.broadcast %cst_5 : f32 to vector<2x64xf32>
    %10 = arith.addf %9, %8 : vector<2x64xf32>
    %11 = arith.divf %9, %10 : vector<2x64xf32>
    %12 = arith.mulf %6, %11 : vector<2x64xf32>
    %13 = arith.truncf %12 : vector<2x64xf32> to vector<2x64xbf16>
    %c0_6 = arith.constant 0 : index
    %c0_7 = arith.constant 0 : index
    %14 = vector.load %arg3[%c0_6, %c0_7] : memref<64x64xbf16, #tpu.memory_space<vmem>>, vector<64x64xbf16>
    %cst_8 = arith.constant dense<0.000000e+00> : vector<2x64xf32>
    %15 = tpu.matmul %13, %14, %cst_8 {dimension_numbers = #tpu.dot_dimension_numbers<[1], [0], [0], [1], [0, 0, 1, 1], [], []>} : vector<2x64xbf16>, vector<64x64xbf16>, vector<2x64xf32> -> vector<2x64xf32>
    %c0_9 = arith.constant 0 : index
    %c0_10 = arith.constant 0 : index
    %16 = vector.load %arg4[%c0_9, %c0_10] : memref<1x64xf32, #tpu.memory_space<vmem>>, vector<1x64xf32>
    %17 = vector.broadcast %16 : vector<1x64xf32> to vector<2x64xf32>
    %18 = arith.addf %15, %17 : vector<2x64xf32>
    %c0_11 = arith.constant 0 : index
    %c0_12 = arith.constant 0 : index
    %19 = vector.load %arg5[%c0_11, %c0_12] : memref<2x64xf32, #tpu.memory_space<vmem>>, vector<2x64xf32>
    tpu.vector_store %arg5[%c0_11, %c0_12], %18 {strides = array<i32>} : memref<2x64xf32, #tpu.memory_space<vmem>>, vector<2x64xf32>,
    return
  }
}

</mosaic_0001>

<llo_original>
// kernel: time_style_separate_embed.1
$region0: #{time_style_separate_embed.1}
  #allocation0 [shape = 'u32[]', space=smem, size = 0x4, offset = 0x4, fixed_abs, tag = 'smem constant byte address 0x4 - core index']
  #allocation1 [shape = 'u32[144,128]{1,0:T(1,128)}', space=vmem, size = 0x12000, scoped, tag = 'internal scratch']
  %s0 = inlined_call_operand.hbm [shape: f32[2,32], index: 0, kind: input, shape index: {}]
  %s1 = inlined_call_operand.hbm [shape: bf16[32,64], index: 1, kind: input, shape index: {}]
  %s2 = inlined_call_operand.vmem [shape: f32[1,64], index: 2, kind: input, shape index: {}]
  %s3 = inlined_call_operand.hbm [shape: bf16[64,64], index: 3, kind: input, shape index: {}]
  %s4 = inlined_call_operand.vmem [shape: f32[1,64], index: 4, kind: input, shape index: {}]
  %s5 = inlined_call_operand.hbm [shape: f32[2,64], index: 5, kind: output, shape index: {}]
  %s6 = sld [smem:[#allocation0]]
  $region42: #{time_style_separate_embed.1} parent=0
    _
  %s8 = ssub.s32 1, %s6
  %s9 = scalar_select 0, %s8, %s6
  $region1: #{time_style_separate_embed.1} parent=0
    #allocation2 [shape = 'u8[1024]{0}', space=vmem, size = 0x400, scoped, tag = 'input window, operand 0, single buffered']
    #allocation3 [shape = 's32[1]{0}', space=sflag, size = 0x4, scoped, tag = 'scoped memory for time_style_separate_embed.1']
    #allocation4 [shape = 's32[1]{0}', space=sflag, size = 0x4, scoped, tag = 'scoped memory for time_style_separate_embed.1']
    #allocation5 [shape = 'u8[8192]{0}', space=vmem, size = 0x2000, scoped, tag = 'input window, operand 1, single buffered']
    #allocation6 [shape = 's32[1]{0}', space=sflag, size = 0x4, scoped, tag = 'scoped memory for time_style_separate_embed.1']
    #allocation7 [shape = 'u8[16384]{0}', space=vmem, size = 0x4000, scoped, tag = 'input window, operand 3, single buffered']
    #allocation8 [shape = 'u8[1024]{0}', space=vmem, size = 0x400, scoped, tag = 'output window, operand 0, single buffered']
    %10 = vsyncpa [#allocation3], 0
    %11 = vsyncpa [#allocation6], 0
    %12 = vsyncpa [#allocation4], 0
    // Predicated region
    $region2: #{time_style_separate_embed.1} parent=1 // pred_check
      _
    $region3: #{time_style_separate_embed.1} parent=1 // pred_check_branch
      %14 = sbr.rel (0) target = $region5
    $region4: #{time_style_separate_embed.1} parent=1 // pred_region
      %s16 = ssub.s32 32, 32
      %17 = vsyncadd [#allocation3], %s16
      %s19 = sshll.u32 [#allocation2], 4
      %s20 = int_to_ptr.vmem [resolvable:$true] %s19
      %22 = dma.hbm_to_vmem [thread:$0]  %s0, 32, %s20, [#allocation3]
    $region5: #{time_style_separate_embed.1} parent=1 // pred_fallthru
      _
    // Predicated region
    $region6: #{time_style_separate_embed.1} parent=1 // pred_check
      _
    $region7: #{time_style_separate_embed.1} parent=1 // pred_check_branch
      %24 = sbr.rel (0) target = $region9
    $region8: #{time_style_separate_embed.1} parent=1 // pred_region
      %s26 = ssub.s32 256, 256
      %27 = vsyncadd [#allocation6], %s26
      %s28 = sshll.u32 [#allocation5], 4
      %s29 = int_to_ptr.vmem [resolvable:$true] %s28
      %34 = dma.hbm_to_vmem [thread:$0]  %s1, 256, %s29, [#allocation6], 64, 64, 4
    $region9: #{time_style_separate_embed.1} parent=1 // pred_fallthru
      _
    // Predicated region
    $region10: #{time_style_separate_embed.1} parent=1 // pred_check
      _
    $region11: #{time_style_separate_embed.1} parent=1 // pred_check_branch
      %36 = sbr.rel (0) target = $region13
    $region12: #{time_style_separate_embed.1} parent=1 // pred_region
      _
    $region13: #{time_style_separate_embed.1} parent=1 // pred_fallthru
      _
    // Predicated region
    $region14: #{time_style_separate_embed.1} parent=1 // pred_check
      _
    $region15: #{time_style_separate_embed.1} parent=1 // pred_check_branch
      %38 = sbr.rel (0) target = $region17
    $region16: #{time_style_separate_embed.1} parent=1 // pred_region
      %s40 = ssub.s32 512, 512
      %41 = vsyncadd [#allocation6], %s40
      %s42 = sshll.u32 [#allocation7], 4
      %s43 = int_to_ptr.vmem [resolvable:$true] %s42
      %48 = dma.hbm_to_vmem [thread:$0]  %s3, 512, %s43, [#allocation6], 64, 64, 4
    $region17: #{time_style_separate_embed.1} parent=1 // pred_fallthru
      _
    // Predicated region
    $region18: #{time_style_separate_embed.1} parent=1 // pred_check
      _
    $region19: #{time_style_separate_embed.1} parent=1 // pred_check_branch
      %50 = sbr.rel (0) target = $region21
    $region20: #{time_style_separate_embed.1} parent=1 // pred_region
      _
    $region21: #{time_style_separate_embed.1} parent=1 // pred_fallthru
      _
    // Predicated region
    $region22: #{time_style_separate_embed.1} parent=1 // pred_check
      _
    $region23: #{time_style_separate_embed.1} parent=1 // pred_check_branch
      %52 = sbr.rel (0) target = $region25
    $region24: #{time_style_separate_embed.1} parent=1 // pred_region
      %53 = dma.done [#allocation3], 32
    $region25: #{time_style_separate_embed.1} parent=1 // pred_fallthru
      _
    // Predicated region
    $region26: #{time_style_separate_embed.1} parent=1 // pred_check
      _
    $region27: #{time_style_separate_embed.1} parent=1 // pred_check_branch
      %55 = sbr.rel (0) target = $region29
    $region28: #{time_style_separate_embed.1} parent=1 // pred_region
      %56 = dma.done [#allocation6], 256
    $region29: #{time_style_separate_embed.1} parent=1 // pred_fallthru
      _
    // Predicated region
    $region30: #{time_style_separate_embed.1} parent=1 // pred_check
      _
    $region31: #{time_style_separate_embed.1} parent=1 // pred_check_branch
      %58 = sbr.rel (0) target = $region33
    $region32: #{time_style_separate_embed.1} parent=1 // pred_region
      %59 = dma.done [#allocation6], 512
    $region33: #{time_style_separate_embed.1} parent=1 // pred_fallthru
      _
    %v61 = vld [vmem:[#allocation2] sm:$0x3]
    %v62 = vpack.c.bf16 %v61, %v61
    %v63 = vld [vmem:[#allocation5] sm:$0xf]
    %v64 = vld [vmem:[#allocation5 + $0x4] sm:$0xf]
    %v65 = vld [vmem:[#allocation5 + $0x8] sm:$0xf]
    %v66 = vld [vmem:[#allocation5 + $0xc] sm:$0xf]
    %v67 = vld [vmem:[%s2] sm:$0x1]
    %v69 = vlaneseq
    %v70 = vshrl.u32 %v69, 7
    %v71 = vsub.s32 0, %v70
    %v72 = vrot.slane %v67, %v71
    %v78 = vunpack.c.l.b16 %v63
    %v79 = vunpack.c.l.b16 %v64
    %v80 = vunpack.c.l.b16 %v65
    %v81 = vunpack.c.l.b16 %v66
    %v82 = vpack.c.b16 %v79, %v78
    %v83 = vpack.c.b16 %v81, %v80
    %vm86 = vcmask 261120
    %v88 = vsel %vm86, %v62, 0
    %90 = vmatprep.subr.bf16.mxu0 0
    %91 = vmatpush1.bf16.msra.mxu0 0
    %92 = vmatprep.subr.bf16.mxu0 0
    %93 = vmatpush1.bf16.msra.mxu0 0
    %94 = vmatprep.subr.bf16.mxu0 0
    %95 = vmatpush1.bf16.msra.mxu0 0
    %96 = vmatprep.subr.bf16.mxu0 0
    %97 = vmatpush1.bf16.msra.mxu0 0
    %98 = vmatprep.subr.bf16.mxu0 0
    %99 = vmatpush1.bf16.msra.mxu0 0
    %100 = vmatprep.subr.bf16.mxu0 0
    %101 = vmatpush1.bf16.msra.mxu0 0
    %102 = vmatprep.subr.bf16.mxu0 0
    %103 = vmatpush1.bf16.msra.mxu0 %v83
    %104 = vmatprep.subr.bf16.mxu0 0
    %105 = vmatpush1.bf16.msra.mxu0 %v82
    %106 = vmatprep.subr.bf16.mxu0 0
    %107 = vmatpush2.bf16.msra.mxu0 0
    %108 = vmatprep.subr.bf16.mxu0 0
    %109 = vmatpush2.bf16.msra.mxu0 0
    %110 = vmatprep.subr.bf16.mxu0 0
    %111 = vmatpush2.bf16.msra.mxu0 0
    %112 = vmatprep.subr.bf16.mxu0 0
    %113 = vmatpush2.bf16.msra.mxu0 0
    %114 = vmatprep.subr.bf16.mxu0 0
    %115 = vmatpush2.bf16.msra.mxu0 0
    %116 = vmatprep.subr.bf16.mxu0 0
    %117 = vmatpush2.bf16.msra.mxu0 0
    %118 = vmatprep.subr.bf16.mxu0 0
    %119 = vmatpush2.bf16.msra.mxu0 0
    %120 = vmatprep.subr.bf16.mxu0 0
    %121 = vmatpush2.bf16.msra.mxu0 0
    %122 = vmatprep.mubr.bf16.mxu0 0
    %123 = vmatmul.mubr.bf16.gmra.mxu0 %v88
    %v124 = vpop.f32.mrf.mxu0
    %v125 = vadd.f32 %v72, %v124
    %v126 = vpop.f32.mrf.mxu0
    %v127 = vpop.f32.mrf.mxu0
    %v128 = vpop.f32.mrf.mxu0
    %129 = vdwg.mxu0
    %v130 = vxor.u32 %v125, 2147483648
    %v131 = vmul.f32 %v130, 1.442695
    %v132 = vpow.pop %v131
    %v133 = vadd.f32 %v132, 1.0
    %v134 = vrcp.pop %v133
    %v135 = vmul.f32 1.0, %v134
    %v136 = vmul.f32 %v125, %v135
    %v137 = vpack.c.bf16 %v136, %v136
    %v138 = vld [vmem:[#allocation7] sm:$0xf]
    %v139 = vld [vmem:[#allocation7 + $0x4] sm:$0xf]
    %v140 = vld [vmem:[#allocation7 + $0x8] sm:$0xf]
    %v141 = vld [vmem:[#allocation7 + $0xc] sm:$0xf]
    %v142 = vld [vmem:[#allocation7 + $0x10] sm:$0xf]
    %v143 = vld [vmem:[#allocation7 + $0x14] sm:$0xf]
    %v144 = vld [vmem:[#allocation7 + $0x18] sm:$0xf]
    %v145 = vld [vmem:[#allocation7 + $0x1c] sm:$0xf]
    %v146 = vld [vmem:[%s4] sm:$0x1]
    %v148 = vlaneseq
    %v149 = vshrl.u32 %v148, 7
    %v150 = vsub.s32 0, %v149
    %v151 = vrot.slane %v146, %v150
    %v161 = vunpack.c.l.b16 %v138
    %v162 = vunpack.c.l.b16 %v139
    %v163 = vunpack.c.l.b16 %v140
    %v164 = vunpack.c.l.b16 %v141
    %v165 = vunpack.c.l.b16 %v142
    %v166 = vunpack.c.l.b16 %v143
    %v167 = vunpack.c.l.b16 %v144
    %v168 = vunpack.c.l.b16 %v145
    %v169 = vpack.c.b16 %v162, %v161
    %v170 = vpack.c.b16 %v164, %v163
    %v171 = vpack.c.b16 %v166, %v165
    %v172 = vpack.c.b16 %v168, %v167
    %vm177 = vcmask 523264
    %v179 = vsel %vm177, %v137, 0
    %181 = vmatprep.subr.bf16.mxu0 0
    %182 = vmatpush1.bf16.msra.mxu0 0
    %183 = vmatprep.subr.bf16.mxu0 0
    %184 = vmatpush1.bf16.msra.mxu0 0
    %185 = vmatprep.subr.bf16.mxu0 0
    %186 = vmatpush1.bf16.msra.mxu0 0
    %187 = vmatprep.subr.bf16.mxu0 0
    %188 = vmatpush1.bf16.msra.mxu0 0
    %189 = vmatprep.subr.bf16.mxu0 0
    %190 = vmatpush1.bf16.msra.mxu0 %v172
    %191 = vmatprep.subr.bf16.mxu0 0
    %192 = vmatpush1.bf16.msra.mxu0 %v171
    %193 = vmatprep.subr.bf16.mxu0 0
    %194 = vmatpush1.bf16.msra.mxu0 %v170
    %195 = vmatprep.subr.bf16.mxu0 0
    %196 = vmatpush1.bf16.msra.mxu0 %v169
    %197 = vmatprep.subr.bf16.mxu0 0
    %198 = vmatpush2.bf16.msra.mxu0 0
    %199 = vmatprep.subr.bf16.mxu0 0
    %200 = vmatpush2.bf16.msra.mxu0 0
    %201 = vmatprep.subr.bf16.mxu0 0
    %202 = vmatpush2.bf16.msra.mxu0 0
    %203 = vmatprep.subr.bf16.mxu0 0
    %204 = vmatpush2.bf16.msra.mxu0 0
    %205 = vmatprep.subr.bf16.mxu0 0
    %206 = vmatpush2.bf16.msra.mxu0 0
    %207 = vmatprep.subr.bf16.mxu0 0
    %208 = vmatpush2.bf16.msra.mxu0 0
    %209 = vmatprep.subr.bf16.mxu0 0
    %210 = vmatpush2.bf16.msra.mxu0 0
    %211 = vmatprep.subr.bf16.mxu0 0
    %212 = vmatpush2.bf16.msra.mxu0 0
    %213 = vmatprep.mubr.bf16.mxu0 0
    %214 = vmatmul.mubr.bf16.gmra.mxu0 %v179
    %v215 = vpop.f32.mrf.mxu0
    %v216 = vadd.f32 %v151, %v215
    %v217 = vpop.f32.mrf.mxu0
    %v218 = vpop.f32.mrf.mxu0
    %v219 = vpop.f32.mrf.mxu0
    %220 = vdwg.mxu0
    %vm221 = vcmask 517120
    %222 = vst.msk [vmem:[#allocation8] sm:$0x3] %vm221, %v216
    // Predicated region
    $region34: #{time_style_separate_embed.1} parent=1 // pred_check
      _
    $region35: #{time_style_separate_embed.1} parent=1 // pred_check_branch
      %224 = sbr.rel (0) target = $region37
    $region36: #{time_style_separate_embed.1} parent=1 // pred_region
      %s226 = ssub.s32 32, 32
      %227 = vsyncadd [#allocation4], %s226
      %s229 = sshll.u32 [#allocation8], 4
      %s230 = int_to_ptr.vmem [resolvable:$true] %s229
      %232 = dma.vmem_to_hbm [thread:$0]  %s230, 32, %s5, [#allocation4]
    $region37: #{time_style_separate_embed.1} parent=1 // pred_fallthru
      _
    // Predicated region
    $region38: #{time_style_separate_embed.1} parent=1 // pred_check
      _
    $region39: #{time_style_separate_embed.1} parent=1 // pred_check_branch
      %234 = sbr.rel (0) target = $region41
    $region40: #{time_style_separate_embed.1} parent=1 // pred_region
      %235 = dma.done [#allocation4], 32
    $region41: #{time_style_separate_embed.1} parent=1 // pred_fallthru
      _
    %236 = vsyncpa [#allocation3], 1
    %237 = vsyncpa [#allocation6], 1
    %238 = vsyncpa [#allocation4], 1

</llo_original>
